<compile_context>
chip_gen: v7x
topology: tpu7x:2x2x1
jax: 0.10.0
libtpu: 0.0.40
codegen_flags: <defaults>
</compile_context>

<pallas_src>
import functools
import math

import jax
import jax.numpy as jnp
from jax import lax
from jax.experimental import pallas as pl
from jax.experimental.pallas import tpu as pltpu


# ----------------------------- tiling helpers -----------------------------

def _pick_tile(dim, target, align):
    """Largest multiple of `align` <= target that evenly divides `dim`, else the
    full dim (so small/toy shapes fall back to a single whole-array block)."""
    if dim <= target:
        return dim
    t = (target // align) * align
    while t >= align:
        if dim % t == 0:
            return t
        t -= align
    return dim


# ----------------------------- Pallas kernels -----------------------------

def _gelu(y):
    # TODO(synk): HF RoBERTa uses exact (erf) GELU; tanh approximation is used
    # for a Mosaic-safe transcendental lowering (runs on the EUP).
    c = 0.7978845608028654  # sqrt(2/pi)
    return 0.5 * y * (1.0 + jnp.tanh(c * (y + 0.044715 * y * y * y)))


def _linear_kernel(x_ref, w_ref, b_ref, o_ref, acc_ref, *, act, nk):
    @pl.when(pl.program_id(2) == 0)
    def _():
        acc_ref[...] = jnp.zeros_like(acc_ref)

    acc_ref[...] += jnp.dot(x_ref[...].astype(jnp.bfloat16), w_ref[...],
                            preferred_element_type=jnp.float32)

    @pl.when(pl.program_id(2) == nk - 1)
    def _():
        y = acc_ref[...] + b_ref[...].astype(jnp.float32)
        if act == "gelu":
            y = _gelu(y)
        elif act == "tanh":
            y = jnp.tanh(y)
        o_ref[...] = y.astype(o_ref.dtype)


def linear(x, w, b, act=None):
    """y = act(x @ w + b); x: (M, K) f32, w: (K, N) bf16, b: (N,) f32."""
    M, K = x.shape
    _, N = w.shape
    tm = _pick_tile(M, 256, 8)
    tn = _pick_tile(N, 512, 128)
    tk = _pick_tile(K, 512, 128)
    nk = K // tk
    return pl.pallas_call(
        functools.partial(_linear_kernel, act=act, nk=nk),
        out_shape=jax.ShapeDtypeStruct((M, N), jnp.float32),
        grid=(M // tm, N // tn, nk),
        in_specs=[
            pl.BlockSpec((tm, tk), lambda i, j, k: (i, k)),
            pl.BlockSpec((tk, tn), lambda i, j, k: (k, j)),
            pl.BlockSpec((1, tn), lambda i, j, k: (0, j)),
        ],
        out_specs=pl.BlockSpec((tm, tn), lambda i, j, k: (i, j)),
        scratch_shapes=[pltpu.VMEM((tm, tn), jnp.float32)],
        compiler_params=pltpu.CompilerParams(
            dimension_semantics=("parallel", "parallel", "arbitrary")),
    )(x, w, b.reshape(1, N))


def _linear_res_ln_kernel(x_ref, w_ref, b_ref, r_ref, g_ref, bt_ref,
                          o_ref, acc_ref, *, eps, nk):
    @pl.when(pl.program_id(1) == 0)
    def _():
        acc_ref[...] = jnp.zeros_like(acc_ref)

    acc_ref[...] += jnp.dot(x_ref[...].astype(jnp.bfloat16), w_ref[...],
                            preferred_element_type=jnp.float32)

    @pl.when(pl.program_id(1) == nk - 1)
    def _():
        y = (acc_ref[...] + b_ref[...].astype(jnp.float32)
             + r_ref[...].astype(jnp.float32))
        mean = jnp.mean(y, axis=-1, keepdims=True)
        var = jnp.mean(jnp.square(y - mean), axis=-1, keepdims=True)
        y = (y - mean) * lax.rsqrt(var + eps)
        y = y * g_ref[...].astype(jnp.float32) + bt_ref[...].astype(jnp.float32)
        o_ref[...] = y.astype(o_ref.dtype)


def linear_residual_ln(x, w, b, res, gamma, beta, eps):
    """LayerNorm(x @ w + b + res) over the last axis; fused single kernel."""
    M, K = x.shape
    _, N = w.shape
    tm = _pick_tile(M, 256, 8)
    tk = _pick_tile(K, 512, 128)
    nk = K // tk
    return pl.pallas_call(
        functools.partial(_linear_res_ln_kernel, eps=eps, nk=nk),
        out_shape=jax.ShapeDtypeStruct((M, N), jnp.float32),
        grid=(M // tm, nk),
        in_specs=[
            pl.BlockSpec((tm, tk), lambda i, k: (i, k)),
            pl.BlockSpec((tk, N), lambda i, k: (k, 0)),
            pl.BlockSpec((1, N), lambda i, k: (0, 0)),
            pl.BlockSpec((tm, N), lambda i, k: (i, 0)),
            pl.BlockSpec((1, N), lambda i, k: (0, 0)),
            pl.BlockSpec((1, N), lambda i, k: (0, 0)),
        ],
        out_specs=pl.BlockSpec((tm, N), lambda i, k: (i, 0)),
        scratch_shapes=[pltpu.VMEM((tm, N), jnp.float32)],
        compiler_params=pltpu.CompilerParams(
            dimension_semantics=("parallel", "arbitrary")),
    )(x, w, b.reshape(1, N), res, gamma.reshape(1, N), beta.reshape(1, N))


def _layernorm_kernel(x_ref, g_ref, b_ref, o_ref, *, eps):
    x = x_ref[...].astype(jnp.float32)
    mean = jnp.mean(x, axis=-1, keepdims=True)
    var = jnp.mean(jnp.square(x - mean), axis=-1, keepdims=True)
    y = (x - mean) * lax.rsqrt(var + eps)
    y = y * g_ref[...].astype(jnp.float32) + b_ref[...].astype(jnp.float32)
    o_ref[...] = y.astype(o_ref.dtype)


def layernorm(x, gamma, beta, eps):
    """LayerNorm(x) over the last axis (no residual); x: (M, H)."""
    M, H = x.shape
    tm = _pick_tile(M, 512, 8)
    return pl.pallas_call(
        functools.partial(_layernorm_kernel, eps=eps),
        out_shape=jax.ShapeDtypeStruct((M, H), jnp.float32),
        grid=(M // tm,),
        in_specs=[
            pl.BlockSpec((tm, H), lambda i: (i, 0)),
            pl.BlockSpec((1, H), lambda i: (0, 0)),
            pl.BlockSpec((1, H), lambda i: (0, 0)),
        ],
        out_specs=pl.BlockSpec((tm, H), lambda i: (i, 0)),
        compiler_params=pltpu.CompilerParams(dimension_semantics=("parallel",)),
    )(x, gamma.reshape(1, H), beta.reshape(1, H))


def _attention_kernel(q_ref, k_ref, v_ref, bias_ref, o_ref, *, scale):
    q = q_ref[...].astype(jnp.bfloat16)            # (G, S, D)
    k = k_ref[...].astype(jnp.bfloat16)            # (G, S, D)
    v = v_ref[...].astype(jnp.bfloat16)            # (G, S, D)
    bias = bias_ref[0].astype(jnp.float32)         # (1, S) additive pad mask
    # batched q @ k^T via dot_general (no explicit transpose), f32 accumulation
    s = jnp.einsum('gsd,gtd->gst', q, k, preferred_element_type=jnp.float32)
    s = s * scale + bias                           # bias re-added in f32
    m = jnp.max(s, axis=-1, keepdims=True)
    p = jnp.exp(s - m)
    p = p * pl.reciprocal(jnp.sum(p, axis=-1, keepdims=True), approx=True)
    o = jnp.einsum('gst,gtd->gsd', p.astype(jnp.bfloat16), v,
                   preferred_element_type=jnp.float32)
    o_ref[...] = o.astype(o_ref.dtype)


def attention(q, k, v, bias, scale, n_heads):
    """q, k, v: (B*nH, S, D); bias: (B, 1, S) additive (-1e9 on pad).
    One grid step processes all nH heads of one batch element."""
    BH, S, D = q.shape
    B = BH // n_heads
    qkv_spec = pl.BlockSpec((n_heads, S, D), lambda b: (b, 0, 0))
    return pl.pallas_call(
        functools.partial(_attention_kernel, scale=scale),
        out_shape=jax.ShapeDtypeStruct((BH, S, D), jnp.float32),
        grid=(B,),
        in_specs=[
            qkv_spec,
            qkv_spec,
            qkv_spec,
            pl.BlockSpec((1, 1, S), lambda b: (b, 0, 0)),  # mask shared per batch
        ],
        out_specs=qkv_spec,
        compiler_params=pltpu.CompilerParams(dimension_semantics=("parallel",)),
    )(q, k, v, bias)


def _pooler_head_kernel(cls_ref, pw_ref, pb_ref, fw_ref, fb_ref, o_ref):
    cls = cls_ref[...].astype(jnp.bfloat16)
    pooled = jnp.tanh(
        jnp.dot(cls, pw_ref[...], preferred_element_type=jnp.float32)
        + pb_ref[...].astype(jnp.float32))
    logits = jnp.dot(pooled.astype(jnp.bfloat16), fw_ref[...],
                     preferred_element_type=jnp.float32)
    logits = logits + fb_ref[...].astype(jnp.float32)
    o_ref[...] = logits.astype(o_ref.dtype)


def pooler_head(cls, pool_w, pool_b, fc_w, fc_b):
    """Fused pooler (dense + tanh on CLS) and classifier head (dropout = id)."""
    B, H = cls.shape
    C = fc_w.shape[1]
    return pl.pallas_call(
        _pooler_head_kernel,
        out_shape=jax.ShapeDtypeStruct((B, C), jnp.float32),
        grid=(1,),
        in_specs=[
            pl.BlockSpec((B, H), lambda i: (0, 0)),
            pl.BlockSpec((H, H), lambda i: (0, 0)),
            pl.BlockSpec((1, H), lambda i: (0, 0)),
            pl.BlockSpec((H, C), lambda i: (0, 0)),
            pl.BlockSpec((1, C), lambda i: (0, 0)),
        ],
        out_specs=pl.BlockSpec((B, C), lambda i: (0, 0)),
    )(cls, pool_w, pool_b.reshape(1, H), fc_w, fc_b.reshape(1, C))


# ----------------------------- Model (glue) -----------------------------

def init_params(key, cfg):
    H, I = cfg["hidden"], cfg["intermediate"]
    std = 0.02

    def nrm(k, shape):
        return jax.random.normal(k, shape, jnp.float32) * std

    def w_bf16(k, shape):
        return nrm(k, shape).astype(jnp.bfloat16)  # MXU operands stored in bf16

    keys = jax.random.split(key, 8 + cfg["layers"] * 8)
    it = iter(keys)
    word_emb = nrm(next(it), (cfg["vocab"], H))
    word_emb = word_emb.at[cfg["pad_idx"]].set(0.0)  # RoBERTa zeroes pad embedding
    params = {
        "word_emb": word_emb,
        "pos_emb": nrm(next(it), (cfg["max_pos"], H)),
        "type_emb": nrm(next(it), (cfg["type_vocab"], H)),
        "emb_ln_g": jnp.ones((H,), jnp.float32),
        "emb_ln_b": jnp.zeros((H,), jnp.float32),
        "pool_w": w_bf16(next(it), (H, H)),
        "pool_b": jnp.zeros((H,), jnp.float32),
        "fc_w": w_bf16(next(it), (H, cfg["num_classes"])),
        "fc_b": jnp.zeros((cfg["num_classes"],), jnp.float32),
        "layers": [],
    }
    for _ in range(cfg["layers"]):
        lp = {
            # fused QKV projection weight: [Wq | Wk | Wv] along the output axis
            "wqkv": w_bf16(next(it), (H, 3 * H)),
            "bqkv": jnp.zeros((3 * H,), jnp.float32),
            "wo": w_bf16(next(it), (H, H)), "bo": jnp.zeros((H,), jnp.float32),
            "ln1_g": jnp.ones((H,), jnp.float32), "ln1_b": jnp.zeros((H,), jnp.float32),
            "w1": w_bf16(next(it), (H, I)), "b1": jnp.zeros((I,), jnp.float32),
            "w2": w_bf16(next(it), (I, H)), "b2": jnp.zeros((H,), jnp.float32),
            "ln2_g": jnp.ones((H,), jnp.float32), "ln2_b": jnp.zeros((H,), jnp.float32),
        }
        params["layers"].append(lp)
    return params


def roberta_classifier_forward(params, input_ids, attn_mask, cfg):
    B, S = input_ids.shape
    H, nH = cfg["hidden"], cfg["heads"]
    D = H // nH
    pad_idx = cfg["pad_idx"]
    eps = cfg["ln_eps"]

    # --- embeddings (table gathers are XLA glue; LayerNorm is a Pallas kernel) ---
    tok_mask = (input_ids != pad_idx).astype(jnp.int32)
    pos_ids = jnp.cumsum(tok_mask, axis=1) * tok_mask + pad_idx  # RoBERTa positions
    emb = (params["word_emb"][input_ids]
           + params["pos_emb"][pos_ids]
           + params["type_emb"][jnp.zeros_like(input_ids)])
    x = layernorm(emb.reshape(B * S, H).astype(jnp.float32),
                  params["emb_ln_g"], params["emb_ln_b"], eps)

    # additive attention-mask bias, ONE copy per batch element (heads share it
    # via the attention BlockSpec, no jnp.repeat)
    bias = ((1.0 - attn_mask.astype(jnp.float32)) * -1e9).reshape(B, 1, S)
    scale = 1.0 / math.sqrt(D)

    for lp in params["layers"]:
        # fused QKV projection: single tiled matmul (B*S, H) @ (H, 3H)
        qkv = linear(x, lp["wqkv"], lp["bqkv"])                        # (B*S, 3H)
        qkv = (qkv.reshape(B, S, 3, nH, D)
                  .transpose(2, 0, 3, 1, 4)
                  .reshape(3, B * nH, S, D))
        ctx = attention(qkv[0], qkv[1], qkv[2], bias, scale, nH)       # (B*nH, S, D)
        ctx = ctx.reshape(B, nH, S, D).transpose(0, 2, 1, 3).reshape(B * S, H)

        # attention output projection + residual + LayerNorm, fused in one kernel
        x = linear_residual_ln(ctx, lp["wo"], lp["bo"], x,
                               lp["ln1_g"], lp["ln1_b"], eps)

        # FFN: up-projection with fused bias+GELU; down-projection fused with +res+LN
        h = linear(x, lp["w1"], lp["b1"], act="gelu")
        x = linear_residual_ln(h, lp["w2"], lp["b2"], x,
                               lp["ln2_g"], lp["ln2_b"], eps)

    # --- pooler (dense + tanh on <s>/CLS) + classifier head, fused; dropout = id ---
    cls = x.reshape(B, S, H)[:, 0, :]                                  # (B, H)
    logits = pooler_head(cls, params["pool_w"], params["pool_b"],
                         params["fc_w"], params["fc_b"])               # (B, C)
    return logits


# ----------------------------- Driver -----------------------------

if __name__ == "__main__":
    cfg = dict(
        vocab=64, hidden=32, heads=4, layers=2, intermediate=64,
        max_pos=16, type_vocab=1, pad_idx=1, ln_eps=1e-5, num_classes=3,
    )
    B, S = 2, 8

    key = jax.random.PRNGKey(0)
    k_param, k_ids = jax.random.split(key)

    params = init_params(k_param, cfg)

    input_ids = jax.random.randint(k_ids, (B, S), 3, cfg["vocab"], dtype=jnp.int32)
    input_ids = input_ids.at[:, 0].set(0)                    # <s> token
    input_ids = input_ids.at[1, -2:].set(cfg["pad_idx"])     # pad tail of batch 1
    attn_mask = jnp.ones((B, S), jnp.int32).at[1, -2:].set(0)

    logits = roberta_classifier_forward(params, input_ids, attn_mask, cfg)
    logits = jax.block_until_ready(logits)
    assert logits.shape == (B, cfg["num_classes"])
    print("KERNEL_OK")
</pallas_src>

<mosaic_0001>
module attributes {stable_mosaic.version = 11 : i64} {
  func.func @_layernorm_kernel(%arg0: i32, %arg1: memref<16x32xf32, #tpu.memory_space<vmem>>, %arg2: memref<1x32xf32, #tpu.memory_space<vmem>>, %arg3: memref<1x32xf32, #tpu.memory_space<vmem>>, %arg4: memref<16x32xf32, #tpu.memory_space<vmem>>) attributes {dimension_semantics = [#tpu.dimension_semantics<parallel>], iteration_bounds = array<i64: 1>, scalar_prefetch = 0 : i64, scratch_operands = 0 : i64, tpu.core_type = #tpu.core_type<tc>, window_params = [{transform_indices = @transform_0, window_bounds = array<i64: 16, 32>}, {pipeline_mode = #tpu.pipeline_mode<synchronous>, transform_indices = @transform_1, window_bounds = array<i64: 1, 32>}, {pipeline_mode = #tpu.pipeline_mode<synchronous>, transform_indices = @transform_2, window_bounds = array<i64: 1, 32>}, {transform_indices = @transform_3, window_bounds = array<i64: 16, 32>}]} {
    %c0 = arith.constant 0 : index
    %c0_0 = arith.constant 0 : index
    %0 = vector.load %arg1[%c0, %c0_0] : memref<16x32xf32, #tpu.memory_space<vmem>>, vector<16x32xf32>
    %cst = arith.constant dense<0.000000e+00> : vector<16xf32>
    %1 = vector.multi_reduction <add>, %0, %cst [1] : vector<16x32xf32> to vector<16xf32>
    %2 = vector.shape_cast %1 : vector<16xf32> to vector<16x1xf32>
    %cst_1 = arith.constant 3.200000e+01 : f32
    %3 = vector.broadcast %cst_1 : f32 to vector<16x1xf32>
    %4 = arith.divf %2, %3 : vector<16x1xf32>
    %5 = vector.broadcast %4 : vector<16x1xf32> to vector<16x32xf32>
    %6 = arith.subf %0, %5 : vector<16x32xf32>
    %7 = arith.mulf %6, %6 : vector<16x32xf32>
    %cst_2 = arith.constant dense<0.000000e+00> : vector<16xf32>
    %8 = vector.multi_reduction <add>, %7, %cst_2 [1] : vector<16x32xf32> to vector<16xf32>
    %9 = vector.shape_cast %8 : vector<16xf32> to vector<16x1xf32>
    %cst_3 = arith.constant 3.200000e+01 : f32
    %10 = vector.broadcast %cst_3 : f32 to vector<16x1xf32>
    %11 = arith.divf %9, %10 : vector<16x1xf32>
    %12 = vector.broadcast %4 : vector<16x1xf32> to vector<16x32xf32>
    %13 = arith.subf %0, %12 : vector<16x32xf32>
    %cst_4 = arith.constant 9.99999974E-6 : f32
    %14 = vector.broadcast %cst_4 : f32 to vector<16x1xf32>
    %15 = arith.addf %11, %14 : vector<16x1xf32>
    %16 = math.rsqrt %15 : vector<16x1xf32>
    %17 = vector.broadcast %16 : vector<16x1xf32> to vector<16x32xf32>
    %18 = arith.mulf %13, %17 : vector<16x32xf32>
    %c0_5 = arith.constant 0 : index
    %c0_6 = arith.constant 0 : index
    %19 = vector.load %arg2[%c0_5, %c0_6] : memref<1x32xf32, #tpu.memory_space<vmem>>, vector<1x32xf32>
    %20 = vector.broadcast %19 : vector<1x32xf32> to vector<16x32xf32>
    %21 = arith.mulf %18, %20 : vector<16x32xf32>
    %c0_7 = arith.constant 0 : index
    %c0_8 = arith.constant 0 : index
    %22 = vector.load %arg3[%c0_7, %c0_8] : memref<1x32xf32, #tpu.memory_space<vmem>>, vector<1x32xf32>
    %23 = vector.broadcast %22 : vector<1x32xf32> to vector<16x32xf32>
    %24 = arith.addf %21, %23 : vector<16x32xf32>
    %c0_9 = arith.constant 0 : index
    %c0_10 = arith.constant 0 : index
    %25 = vector.load %arg4[%c0_9, %c0_10] : memref<16x32xf32, #tpu.memory_space<vmem>>, vector<16x32xf32>
    tpu.vector_store %arg4[%c0_9, %c0_10], %24 {strides = array<i32>} : memref<16x32xf32, #tpu.memory_space<vmem>>, vector<16x32xf32>,
    return
  }
  func.func @transform_0(%arg0: i32) -> (i32, i32) {
    %c0_i32 = arith.constant 0 : i32
    %c0_i32_0 = arith.constant 0 : i32
    return %arg0, %c0_i32 : i32, i32
  }
  func.func @transform_1(%arg0: i32) -> (i32, i32) {
    %c0_i32 = arith.constant 0 : i32
    %c0_i32_0 = arith.constant 0 : i32
    %c0_i32_1 = arith.constant 0 : i32
    return %c0_i32, %c0_i32_0 : i32, i32
  }
  func.func @transform_2(%arg0: i32) -> (i32, i32) {
    %c0_i32 = arith.constant 0 : i32
    %c0_i32_0 = arith.constant 0 : i32
    %c0_i32_1 = arith.constant 0 : i32
    return %c0_i32, %c0_i32_0 : i32, i32
  }
  func.func @transform_3(%arg0: i32) -> (i32, i32) {
    %c0_i32 = arith.constant 0 : i32
    %c0_i32_0 = arith.constant 0 : i32
    return %arg0, %c0_i32 : i32, i32
  }
}

</mosaic_0001>

<llo_original>
// kernel: tpu_custom_call.1
$region0: #{tpu_custom_call.1}
  #allocation0 [shape = 'u32[]', space=smem, size = 0x4, offset = 0x4, fixed_abs, tag = 'smem constant byte address 0x4 - core index']
  #allocation1 [shape = 'u32[144,128]{1,0:T(1,128)}', space=vmem, size = 0x12000, scoped, tag = 'internal scratch']
  %s0 = inlined_call_operand.hbm [shape: f32[16,32], index: 0, kind: input, shape index: {}]
  %s1 = inlined_call_operand.vmem [shape: f32[1,32], index: 1, kind: input, shape index: {}]
  %s2 = inlined_call_operand.vmem [shape: f32[1,32], index: 2, kind: input, shape index: {}]
  %s3 = inlined_call_operand.hbm [shape: f32[16,32], index: 3, kind: output, shape index: {}]
  %s4 = sld [smem:[#allocation0]]
  $region26: #{tpu_custom_call.1} parent=0
    _
  %s6 = ssub.s32 1, %s4
  %s7 = scalar_select 0, %s6, %s4
  $region1: #{tpu_custom_call.1} parent=0
    #allocation2 [shape = 'u8[8192]{0}', space=vmem, size = 0x2000, scoped, tag = 'input window, operand 0, single buffered']
    #allocation3 [shape = 's32[1]{0}', space=sflag, size = 0x4, scoped, tag = 'scoped memory for tpu_custom_call.1']
    #allocation4 [shape = 's32[1]{0}', space=sflag, size = 0x4, scoped, tag = 'scoped memory for tpu_custom_call.1']
    #allocation5 [shape = 'u8[8192]{0}', space=vmem, size = 0x2000, scoped, tag = 'output window, operand 0, single buffered']
    %8 = vsyncpa [#allocation3], 0
    %9 = vsyncpa [#allocation4], 0
    // Predicated region
    $region2: #{tpu_custom_call.1} parent=1 // pred_check
      _
    $region3: #{tpu_custom_call.1} parent=1 // pred_check_branch
      %11 = sbr.rel (0) target = $region5
    $region4: #{tpu_custom_call.1} parent=1 // pred_region
      %s13 = ssub.s32 256, 256
      %14 = vsyncadd [#allocation3], %s13
      %s15 = sshll.u32 [#allocation2], 4
      %s16 = int_to_ptr.vmem [resolvable:$true] %s15
      %21 = dma.hbm_to_vmem [thread:$0]  %s0, 256, %s16, [#allocation3], 128, 128, 8
    $region5: #{tpu_custom_call.1} parent=1 // pred_fallthru
      _
    // Predicated region
    $region6: #{tpu_custom_call.1} parent=1 // pred_check
      _
    $region7: #{tpu_custom_call.1} parent=1 // pred_check_branch
      %23 = sbr.rel (0) target = $region9
    $region8: #{tpu_custom_call.1} parent=1 // pred_region
      _
    $region9: #{tpu_custom_call.1} parent=1 // pred_fallthru
      _
    // Predicated region
    $region10: #{tpu_custom_call.1} parent=1 // pred_check
      _
    $region11: #{tpu_custom_call.1} parent=1 // pred_check_branch
      %25 = sbr.rel (0) target = $region13
    $region12: #{tpu_custom_call.1} parent=1 // pred_region
      _
    $region13: #{tpu_custom_call.1} parent=1 // pred_fallthru
      _
    // Predicated region
    $region14: #{tpu_custom_call.1} parent=1 // pred_check
      _
    $region15: #{tpu_custom_call.1} parent=1 // pred_check_branch
      %27 = sbr.rel (0) target = $region17
    $region16: #{tpu_custom_call.1} parent=1 // pred_region
      %28 = dma.done [#allocation3], 256
    $region17: #{tpu_custom_call.1} parent=1 // pred_fallthru
      _
    %v29 = vld [vmem:[#allocation2] sm:$0xff]
    %v30 = vld [vmem:[#allocation2 + $0x8] sm:$0xff]
    %vm31 = vcmask 261120
    %v32 = vsel %vm31, %v29, 0.0
    %33 = vadd.xlane.f32.xlu0 %v32
    %v34 = vpop.xlane.xlu0 %33
    %v35 = vsel %vm31, %v30, 0.0
    %36 = vadd.xlane.f32.xlu0 %v35
    %v37 = vpop.xlane.xlu0 %36
    %v38 = vrcp.pop 32.0
    %v39 = vmul.f32 %v34, %v38
    %v40 = vmul.f32 %v37, %v38
    %v41 = vsub.f32 %v29, %v39
    %v42 = vsub.f32 %v30, %v40
    %v43 = vmul.f32 %v41, %v41
    %v44 = vmul.f32 %v42, %v42
    %v45 = vsel %vm31, %v43, 0.0
    %46 = vadd.xlane.f32.xlu0 %v45
    %v47 = vpop.xlane.xlu0 %46
    %v48 = vsel %vm31, %v44, 0.0
    %49 = vadd.xlane.f32.xlu0 %v48
    %v50 = vpop.xlane.xlu0 %49
    %v51 = vmul.f32 %v47, %v38
    %v52 = vmul.f32 %v50, %v38
    %v53 = vadd.f32 %v51, 1e-05
    %v54 = vadd.f32 %v52, 1e-05
    %v55 = vrsqrt.pop %v53
    %v56 = vrsqrt.pop %v54
    %v57 = vmul.f32 %v41, %v55
    %v58 = vmul.f32 %v42, %v56
    %v59 = vld [vmem:[%s1] sm:$0x1]
    %v61 = vlaneseq
    %v62 = vshrl.u32 %v61, 7
    %v63 = vsub.s32 0, %v62
    %v64 = vrot.slane %v59, %v63
    %v66 = vmul.f32 %v57, %v64
    %v67 = vmul.f32 %v58, %v64
    %v68 = vld [vmem:[%s2] sm:$0x1]
    %v70 = vlaneseq
    %v71 = vshrl.u32 %v70, 7
    %v72 = vsub.s32 0, %v71
    %v73 = vrot.slane %v68, %v72
    %v75 = vadd.f32 %v66, %v73
    %v76 = vadd.f32 %v67, %v73
    %77 = vst.msk [vmem:[#allocation5] sm:$0xff] %vm31, %v75
    %78 = vst.msk [vmem:[#allocation5 + $0x8] sm:$0xff] %vm31, %v76
    // Predicated region
    $region18: #{tpu_custom_call.1} parent=1 // pred_check
      _
    $region19: #{tpu_custom_call.1} parent=1 // pred_check_branch
      %80 = sbr.rel (0) target = $region21
    $region20: #{tpu_custom_call.1} parent=1 // pred_region
      %s82 = ssub.s32 256, 256
      %83 = vsyncadd [#allocation4], %s82
      %s84 = sshll.u32 [#allocation5], 4
      %s85 = int_to_ptr.vmem [resolvable:$true] %s84
      %90 = dma.vmem_to_hbm [thread:$0]  %s85, 256, %s3, [#allocation4], 128, 128, 8
    $region21: #{tpu_custom_call.1} parent=1 // pred_fallthru
      _
    // Predicated region
    $region22: #{tpu_custom_call.1} parent=1 // pred_check
      _
    $region23: #{tpu_custom_call.1} parent=1 // pred_check_branch
      %92 = sbr.rel (0) target = $region25
    $region24: #{tpu_custom_call.1} parent=1 // pred_region
      %93 = dma.done [#allocation4], 256
    $region25: #{tpu_custom_call.1} parent=1 // pred_fallthru
      _
    %94 = vsyncpa [#allocation3], 1
    %95 = vsyncpa [#allocation4], 1

</llo_original>
